<compile_context>
chip_gen: v7x
topology: tpu7x:2x2x1
jax: 0.10.0
libtpu: 0.0.40
codegen_flags: <defaults>
</compile_context>

<pallas_src>
import functools

import jax
import jax.numpy as jnp
import numpy as np
from jax import lax
from jax.experimental import pallas as pl
from jax.experimental.pallas import tpu as pltpu


def _round_up(x: int, m: int) -> int:
    return ((x + m - 1) // m) * m


def _vmem_limit_bytes() -> int:
    """Generation-aware scoped-VMEM limit: ~80% of the physical capacity
    (v7x: 64 MiB/TC, v5e/v6e: 128 MiB), leaving headroom for Mosaic internal
    scratch and pipeline buffers instead of hard-coding 64 MiB."""
    try:
        cap = int(pltpu.get_tpu_info().vmem_capacity_bytes)
    except Exception:
        cap = 64 * 1024 * 1024
    return int(cap * 0.8)


# ----------------------------------------------------------------------------
# Propagation kernel A: whole graph resident in VMEM (small graphs).
#   E_0 resident; L layers unrolled in one grid step; running sum in f32
#   output block; current layer in bf16 scratch for the MXU.
# ----------------------------------------------------------------------------
def _propagate_resident_kernel(adj_ref, e0_ref, out_ref, e_scr, *,
                               num_layer, inv_layers_p1):
    e0 = e0_ref[...]
    out_ref[...] = e0                                  # running layer sum (f32)
    e_scr[...] = e0.astype(jnp.bfloat16)               # current layer (bf16)

    def layer_body(_, carry):
        e_new = jnp.dot(adj_ref[...], e_scr[...],
                        preferred_element_type=jnp.float32)
        out_ref[...] = out_ref[...] + e_new
        e_scr[...] = e_new.astype(jnp.bfloat16)
        return carry

    lax.fori_loop(0, num_layer, layer_body, 0, unroll=True)
    out_ref[...] = out_ref[...] * inv_layers_p1        # precomputed 1/(L+1)


def _propagate_resident(adj_bf16: jax.Array, e0: jax.Array,
                        num_layer: int) -> jax.Array:
    n, d_pad = e0.shape
    kernel = functools.partial(_propagate_resident_kernel,
                               num_layer=num_layer,
                               inv_layers_p1=1.0 / float(num_layer + 1))
    return pl.pallas_call(
        kernel,
        out_shape=jax.ShapeDtypeStruct((n, d_pad), jnp.float32),
        grid_spec=pltpu.PrefetchScalarGridSpec(
            num_scalar_prefetch=0,
            grid=(1,),                                 # single step; layers unrolled inside
            in_specs=[pl.BlockSpec((n, n), lambda i: (0, 0)),        # A (bf16)
                      pl.BlockSpec((n, d_pad), lambda i: (0, 0))],   # E_0 (f32)
            out_specs=pl.BlockSpec((n, d_pad), lambda i: (0, 0)),
            scratch_shapes=[pltpu.VMEM((n, d_pad), jnp.bfloat16)],   # current E_l
        ),
        compiler_params=pltpu.CompilerParams(
            dimension_semantics=("arbitrary",),
            vmem_limit_bytes=_vmem_limit_bytes(),
        ),
    )(adj_bf16, e0)


# ----------------------------------------------------------------------------
# Propagation kernel B: streamed row slabs (one pallas_call per layer).
#   grid = (row_slabs [parallel], contraction k [arbitrary, last]); the f32
#   output block (tile, d_pad) is resident across k and acts as accumulator.
# ----------------------------------------------------------------------------
def _streamed_layer_kernel(adj_ref, e_ref, out_ref):
    @pl.when(pl.program_id(1) == 0)
    def _init():
        out_ref[...] = jnp.zeros_like(out_ref)

    out_ref[...] += jnp.dot(adj_ref[...], e_ref[...],
                            preferred_element_type=jnp.float32)


def _propagate_streamed(adj_bf16: jax.Array, e0: jax.Array,
                        num_layer: int) -> jax.Array:
    n, d_pad = e0.shape
    # MXU-native slabs: multiples of 256 feed the 2x256^2 MXU of v6e/v7x and
    # stay 128-aligned for v5e; >=512-row slabs once the graph is big enough.
    tile = 512 if n >= 2048 else 256
    n_pad = _round_up(n, tile)
    if n_pad != n:
        adj_bf16 = jnp.pad(adj_bf16, ((0, n_pad - n), (0, n_pad - n)))
        e0 = jnp.pad(e0, ((0, n_pad - n), (0, 0)))

    layer_call = pl.pallas_call(
        _streamed_layer_kernel,
        out_shape=jax.ShapeDtypeStruct((n_pad, d_pad), jnp.float32),
        grid_spec=pltpu.PrefetchScalarGridSpec(
            num_scalar_prefetch=0,
            grid=(n_pad // tile, n_pad // tile),       # (row slabs, contraction)
            in_specs=[pl.BlockSpec((tile, tile), lambda i, k: (i, k)),    # A block
                      pl.BlockSpec((tile, d_pad), lambda i, k: (k, 0))],  # E_l block
            out_specs=pl.BlockSpec((tile, d_pad), lambda i, k: (i, 0)),
        ),
        compiler_params=pltpu.CompilerParams(
            dimension_semantics=("parallel", "arbitrary"),   # v7x: 2 TCs split row slabs
            vmem_limit_bytes=_vmem_limit_bytes(),
        ),
    )

    e_sum = e0                                   # running layer sum in f32
    e_cur = e0.astype(jnp.bfloat16)              # current layer, bf16 for the MXU
    for _ in range(num_layer):
        e_new = layer_call(adj_bf16, e_cur)      # (n_pad, d_pad) f32
        e_sum = e_sum + e_new
        e_cur = e_new.astype(jnp.bfloat16)
    return (e_sum * (1.0 / float(num_layer + 1)))[:n]


def lightgcn_propagate(adj_norm: jax.Array, e0: jax.Array, num_layer: int, *,
                       force_streamed: bool = False) -> jax.Array:
    n, d = e0.shape
    assert adj_norm.shape == (n, n)

    # Pad embed_dim to a lane-dense multiple of 128; zero lanes are inert
    # through the matmul / sum / mean / dot-product scoring.
    d_pad = _round_up(d, 128)
    if d_pad != d:
        e0 = jnp.pad(e0, ((0, 0), (0, d_pad - d)))
    if num_layer == 0:
        return e0

    # bf16 adjacency for the MXU (f32 accumulation requested in the kernels).
    # TODO(synk): at realistic N this bandwidth-bound matmul would benefit from
    #             int8+per-row-scale adjacency on v5e/v6e (fp8 on v7x).
    adj_bf16 = adj_norm.astype(jnp.bfloat16)

    if (not force_streamed) and n <= 1024:
        return _propagate_resident(adj_bf16, e0, num_layer)
    return _propagate_streamed(adj_bf16, e0, num_layer)


# ----------------------------------------------------------------------------
# BPR loss kernel.
#   grid = (batch_tiles, K) with K innermost so the u/pos blocks stay resident
#   across the K negative samples (no jnp.tile, no K-fold re-reads); partial
#   sums accumulate in an SMEM scalar and the result is emitted through a
#   lane-dense (1, 128) VMEM output block.
# ----------------------------------------------------------------------------
def _bpr_loss_kernel(u_ref, pos_ref, neg_ref, out_ref, acc_ref, *, inv_count):
    bt = pl.program_id(0)
    kk = pl.program_id(1)

    @pl.when(jnp.logical_and(bt == 0, kk == 0))
    def _init():
        acc_ref[0] = jnp.float32(0.0)

    # diff[r] = <u[r], pos[r] - neg[r]>;  -log(sigmoid(x)) == softplus(-x)
    diff = jnp.sum(u_ref[...] * (pos_ref[...] - neg_ref[0]),
                   axis=-1, keepdims=True)                      # (tb, 1)
    acc_ref[0] = acc_ref[0] + jnp.sum(jax.nn.softplus(-diff))

    @pl.when(jnp.logical_and(bt == pl.num_programs(0) - 1,
                             kk == pl.num_programs(1) - 1))
    def _finalize():
        out_ref[...] = jnp.full(out_ref.shape, acc_ref[0] * inv_count,
                                dtype=jnp.float32)


def bpr_loss_pallas(batch_user_emb: jax.Array,
                    batch_pos_item_emb: jax.Array,
                    batch_neg_item_emb: jax.Array,
                    num_neg: int) -> jax.Array:
    b, d_pad = batch_user_emb.shape
    assert batch_neg_item_emb.shape == (num_neg, b, d_pad)
    assert d_pad % 128 == 0

    # Row-tile the batch axis for large B so the streamed operands stay within
    # a few MiB of VMEM; the toy batch fits in a single tile.
    # TODO(synk): a ragged batch (B not a multiple of the tile) would need
    #             masking of the padded rows before the softplus-sum.
    tb = 512 if (b % 512 == 0) else b
    nbt = b // tb
    inv_count = 1.0 / float(num_neg * b)

    kernel = functools.partial(_bpr_loss_kernel, inv_count=inv_count)
    out = pl.pallas_call(
        kernel,
        out_shape=jax.ShapeDtypeStruct((1, 128), jnp.float32),
        grid_spec=pltpu.PrefetchScalarGridSpec(
            num_scalar_prefetch=0,
            grid=(nbt, num_neg),                     # K innermost -> u/pos resident
            in_specs=[
                pl.BlockSpec((tb, d_pad), lambda bt, kk: (bt, 0)),       # u
                pl.BlockSpec((tb, d_pad), lambda bt, kk: (bt, 0)),       # pos
                pl.BlockSpec((1, tb, d_pad), lambda bt, kk: (kk, bt, 0)),  # neg
            ],
            out_specs=pl.BlockSpec((1, 128), lambda bt, kk: (0, 0)),
            scratch_shapes=[pltpu.SMEM((1,), jnp.float32)],
        ),
        compiler_params=pltpu.CompilerParams(
            dimension_semantics=("arbitrary", "arbitrary")),
    )(batch_user_emb, batch_pos_item_emb, batch_neg_item_emb)
    return out[0, 0]


# ----------------------------------------------------------------------------
# Glue: adjacency construction/normalization, gathers by id, forward, reference
# ----------------------------------------------------------------------------
def build_norm_adj(key, num_user, num_item):
    """Dense symmetric-normalized bipartite adjacency D^-1/2 A D^-1/2."""
    n = num_user + num_item
    r = jax.random.bernoulli(key, p=0.10, shape=(num_user, num_item)).astype(jnp.float32)
    adj = jnp.zeros((n, n), jnp.float32)
    adj = adj.at[:num_user, num_user:].set(r)
    adj = adj.at[num_user:, :num_user].set(r.T)
    deg = jnp.sum(adj, axis=1)
    d_inv_sqrt = jnp.where(deg > 0, 1.0 / jnp.sqrt(jnp.maximum(deg, 1e-12)), 0.0)
    return d_inv_sqrt[:, None] * adj * d_inv_sqrt[None, :]


def lightgcn_forward(adj_norm, user_emb, item_emb, user_ids, item_ids,
                     neg_item_ids, num_layer, force_streamed=False):
    num_user = user_emb.shape[0]
    e0 = jnp.concatenate([user_emb, item_emb], axis=0)                # (N, D)
    aggreg = lightgcn_propagate(adj_norm, e0, num_layer,
                                force_streamed=force_streamed)        # (N, Dp)
    d_pad = aggreg.shape[1]
    all_user_emb = aggreg[:num_user]
    all_item_emb = aggreg[num_user:]

    num_neg, batch = neg_item_ids.shape
    # Embedding gathers by id stay in plain JAX.
    batch_u = jnp.take(all_user_emb, user_ids, axis=0)                # (B, Dp)
    batch_pos = jnp.take(all_item_emb, item_ids, axis=0)              # (B, Dp)
    batch_neg = jnp.take(all_item_emb, neg_item_ids.reshape(-1),
                         axis=0).reshape(num_neg, batch, d_pad)       # (K, B, Dp)

    return bpr_loss_pallas(batch_u, batch_pos, batch_neg, num_neg)


def lightgcn_forward_ref(adj_norm, user_emb, item_emb, user_ids, item_ids,
                         neg_item_ids, num_layer):
    """Plain-JAX f32 reference of the same forward (tolerance check)."""
    e = jnp.concatenate([user_emb, item_emb], axis=0)
    layers = [e]
    for _ in range(num_layer):
        e = adj_norm @ e
        layers.append(e)
    agg = jnp.mean(jnp.stack(layers, axis=0), axis=0)
    nu = user_emb.shape[0]
    au, ai = agg[:nu], agg[nu:]
    u = jnp.take(au, user_ids, axis=0)
    p = jnp.take(ai, item_ids, axis=0)
    loss = 0.0
    for k in range(neg_item_ids.shape[0]):
        ng = jnp.take(ai, neg_item_ids[k], axis=0)
        diff = jnp.sum(u * (p - ng), axis=-1)
        loss = loss + jnp.mean(jax.nn.softplus(-diff))
    return loss / neg_item_ids.shape[0]


if __name__ == "__main__":
    # small, tile-friendly synthetic config (resident-graph path)
    num_user = 48
    num_item = 80          # N = 128
    embed_dim = 32
    num_layer = 2
    num_neg_sample = 2
    edge_dropout = 0.1
    batch_size = 16

    key = jax.random.PRNGKey(0)
    k_adj, k_uemb, k_iemb, k_uid, k_iid, k_neg, k_drop = jax.random.split(key, 7)

    # nn.init.normal_(weight, 0.0, 1.0 / embed_dim)
    user_emb = (1.0 / embed_dim) * jax.random.normal(
        k_uemb, (num_user, embed_dim), jnp.float32)
    item_emb = (1.0 / embed_dim) * jax.random.normal(
        k_iemb, (num_item, embed_dim), jnp.float32)

    adj_norm = build_norm_adj(k_adj, num_user, num_item)

    # SparseDropout on adjacency values (training-mode), deterministic mask
    keep = jax.random.bernoulli(k_drop, p=1.0 - edge_dropout, shape=adj_norm.shape)
    adj_norm = adj_norm * keep.astype(jnp.float32) / (1.0 - edge_dropout)

    # batch + negative samples (sample_items -> uniform random item ids)
    user_ids = jax.random.randint(k_uid, (batch_size,), 0, num_user)
    item_ids = jax.random.randint(k_iid, (batch_size,), 0, num_item)
    neg_item_ids = jax.random.randint(k_neg, (num_neg_sample, batch_size), 0, num_item)

    fwd = jax.jit(functools.partial(lightgcn_forward, num_layer=num_layer))
    loss = jax.block_until_ready(
        fwd(adj_norm, user_emb, item_emb, user_ids, item_ids, neg_item_ids))
    ref = lightgcn_forward_ref(adj_norm, user_emb, item_emb, user_ids, item_ids,
                               neg_item_ids, num_layer)
    assert np.isfinite(float(loss)), "loss is not finite"
    np.testing.assert_allclose(float(loss), float(ref), rtol=5e-2, atol=5e-3)

    # also exercise the streamed row-slab propagation path (256x256 bf16 A
    # blocks, parallel row axis) on a slightly larger graph
    nu2, ni2 = 192, 320    # N = 512 -> grid (2, 2)
    ks = jax.random.split(jax.random.PRNGKey(1), 6)
    ue2 = (1.0 / embed_dim) * jax.random.normal(ks[0], (nu2, embed_dim), jnp.float32)
    ie2 = (1.0 / embed_dim) * jax.random.normal(ks[1], (ni2, embed_dim), jnp.float32)
    adj2 = build_norm_adj(ks[2], nu2, ni2)
    uid2 = jax.random.randint(ks[3], (batch_size,), 0, nu2)
    iid2 = jax.random.randint(ks[4], (batch_size,), 0, ni2)
    nid2 = jax.random.randint(ks[5], (num_neg_sample, batch_size), 0, ni2)

    fwd2 = jax.jit(functools.partial(lightgcn_forward, num_layer=num_layer,
                                     force_streamed=True))
    loss2 = jax.block_until_ready(fwd2(adj2, ue2, ie2, uid2, iid2, nid2))
    ref2 = lightgcn_forward_ref(adj2, ue2, ie2, uid2, iid2, nid2, num_layer)
    assert np.isfinite(float(loss2)), "streamed-path loss is not finite"
    np.testing.assert_allclose(float(loss2), float(ref2), rtol=5e-2, atol=5e-3)

    print("KERNEL_OK")
</pallas_src>

<mosaic_0001>
module attributes {stable_mosaic.version = 11 : i64} {
  func.func @_propagate_resident_kernel(%arg0: i32, %arg1: memref<128x128xbf16, #tpu.memory_space<vmem>>, %arg2: memref<128x128xf32, #tpu.memory_space<vmem>>, %arg3: memref<128x128xf32, #tpu.memory_space<vmem>>, %arg4: memref<128x128xbf16, #tpu.memory_space<vmem>>) attributes {dimension_semantics = [#tpu.dimension_semantics<arbitrary>], iteration_bounds = array<i64: 1>, scalar_prefetch = 0 : i64, scratch_operands = 1 : i64, tpu.core_type = #tpu.core_type<tc>, window_params = [{pipeline_mode = #tpu.pipeline_mode<synchronous>, transform_indices = @transform_0, window_bounds = array<i64: 128, 128>}, {pipeline_mode = #tpu.pipeline_mode<synchronous>, transform_indices = @transform_1, window_bounds = array<i64: 128, 128>}, {pipeline_mode = #tpu.pipeline_mode<synchronous>, transform_indices = @transform_2, window_bounds = array<i64: 128, 128>}]} {
    %c0 = arith.constant 0 : index
    %c0_0 = arith.constant 0 : index
    %0 = vector.load %arg2[%c0, %c0_0] : memref<128x128xf32, #tpu.memory_space<vmem>>, vector<128x128xf32>
    %c0_1 = arith.constant 0 : index
    %c0_2 = arith.constant 0 : index
    %1 = vector.load %arg3[%c0_1, %c0_2] : memref<128x128xf32, #tpu.memory_space<vmem>>, vector<128x128xf32>
    tpu.vector_store %arg3[%c0_1, %c0_2], %0 {strides = array<i32>} : memref<128x128xf32, #tpu.memory_space<vmem>>, vector<128x128xf32>,
    %2 = arith.truncf %0 : vector<128x128xf32> to vector<128x128xbf16>
    %c0_3 = arith.constant 0 : index
    %c0_4 = arith.constant 0 : index
    %3 = vector.load %arg4[%c0_3, %c0_4] : memref<128x128xbf16, #tpu.memory_space<vmem>>, vector<128x128xbf16>
    tpu.vector_store %arg4[%c0_3, %c0_4], %2 {strides = array<i32>} : memref<128x128xbf16, #tpu.memory_space<vmem>>, vector<128x128xbf16>,
    %c0_i32 = arith.constant 0 : i32
    %c0_5 = arith.constant 0 : index
    %c0_6 = arith.constant 0 : index
    %4 = vector.load %arg1[%c0_5, %c0_6] : memref<128x128xbf16, #tpu.memory_space<vmem>>, vector<128x128xbf16>
    %c0_7 = arith.constant 0 : index
    %c0_8 = arith.constant 0 : index
    %5 = vector.load %arg4[%c0_7, %c0_8] : memref<128x128xbf16, #tpu.memory_space<vmem>>, vector<128x128xbf16>
    %cst = arith.constant dense<0.000000e+00> : vector<128x128xf32>
    %6 = tpu.matmul %4, %5, %cst {dimension_numbers = #tpu.dot_dimension_numbers<[1], [0], [0], [1], [0, 0, 1, 1], [], []>} : vector<128x128xbf16>, vector<128x128xbf16>, vector<128x128xf32> -> vector<128x128xf32>
    %c0_9 = arith.constant 0 : index
    %c0_10 = arith.constant 0 : index
    %7 = vector.load %arg3[%c0_9, %c0_10] : memref<128x128xf32, #tpu.memory_space<vmem>>, vector<128x128xf32>
    %8 = arith.addf %7, %6 : vector<128x128xf32>
    %c0_11 = arith.constant 0 : index
    %c0_12 = arith.constant 0 : index
    %9 = vector.load %arg3[%c0_11, %c0_12] : memref<128x128xf32, #tpu.memory_space<vmem>>, vector<128x128xf32>
    tpu.vector_store %arg3[%c0_11, %c0_12], %8 {strides = array<i32>} : memref<128x128xf32, #tpu.memory_space<vmem>>, vector<128x128xf32>,
    %10 = arith.truncf %6 : vector<128x128xf32> to vector<128x128xbf16>
    %c0_13 = arith.constant 0 : index
    %c0_14 = arith.constant 0 : index
    %11 = vector.load %arg4[%c0_13, %c0_14] : memref<128x128xbf16, #tpu.memory_space<vmem>>, vector<128x128xbf16>
    tpu.vector_store %arg4[%c0_13, %c0_14], %10 {strides = array<i32>} : memref<128x128xbf16, #tpu.memory_space<vmem>>, vector<128x128xbf16>,
    %c1_i32 = arith.constant 1 : i32
    %c0_15 = arith.constant 0 : index
    %c0_16 = arith.constant 0 : index
    %12 = vector.load %arg1[%c0_15, %c0_16] : memref<128x128xbf16, #tpu.memory_space<vmem>>, vector<128x128xbf16>
    %c0_17 = arith.constant 0 : index
    %c0_18 = arith.constant 0 : index
    %13 = vector.load %arg4[%c0_17, %c0_18] : memref<128x128xbf16, #tpu.memory_space<vmem>>, vector<128x128xbf16>
    %cst_19 = arith.constant dense<0.000000e+00> : vector<128x128xf32>
    %14 = tpu.matmul %12, %13, %cst_19 {dimension_numbers = #tpu.dot_dimension_numbers<[1], [0], [0], [1], [0, 0, 1, 1], [], []>} : vector<128x128xbf16>, vector<128x128xbf16>, vector<128x128xf32> -> vector<128x128xf32>
    %c0_20 = arith.constant 0 : index
    %c0_21 = arith.constant 0 : index
    %15 = vector.load %arg3[%c0_20, %c0_21] : memref<128x128xf32, #tpu.memory_space<vmem>>, vector<128x128xf32>
    %16 = arith.addf %15, %14 : vector<128x128xf32>
    %c0_22 = arith.constant 0 : index
    %c0_23 = arith.constant 0 : index
    %17 = vector.load %arg3[%c0_22, %c0_23] : memref<128x128xf32, #tpu.memory_space<vmem>>, vector<128x128xf32>
    tpu.vector_store %arg3[%c0_22, %c0_23], %16 {strides = array<i32>} : memref<128x128xf32, #tpu.memory_space<vmem>>, vector<128x128xf32>,
    %18 = arith.truncf %14 : vector<128x128xf32> to vector<128x128xbf16>
    %c0_24 = arith.constant 0 : index
    %c0_25 = arith.constant 0 : index
    %19 = vector.load %arg4[%c0_24, %c0_25] : memref<128x128xbf16, #tpu.memory_space<vmem>>, vector<128x128xbf16>
    tpu.vector_store %arg4[%c0_24, %c0_25], %18 {strides = array<i32>} : memref<128x128xbf16, #tpu.memory_space<vmem>>, vector<128x128xbf16>,
    %c0_26 = arith.constant 0 : index
    %c0_27 = arith.constant 0 : index
    %20 = vector.load %arg3[%c0_26, %c0_27] : memref<128x128xf32, #tpu.memory_space<vmem>>, vector<128x128xf32>
    %cst_28 = arith.constant 0.333333343 : f32
    %21 = vector.broadcast %cst_28 : f32 to vector<128x128xf32>
    %22 = arith.mulf %20, %21 : vector<128x128xf32>
    %c0_29 = arith.constant 0 : index
    %c0_30 = arith.constant 0 : index
    %23 = vector.load %arg3[%c0_29, %c0_30] : memref<128x128xf32, #tpu.memory_space<vmem>>, vector<128x128xf32>
    tpu.vector_store %arg3[%c0_29, %c0_30], %22 {strides = array<i32>} : memref<128x128xf32, #tpu.memory_space<vmem>>, vector<128x128xf32>,
    return
  }
  func.func @transform_0(%arg0: i32) -> (i32, i32) {
    %c0_i32 = arith.constant 0 : i32
    %c0_i32_0 = arith.constant 0 : i32
    %c0_i32_1 = arith.constant 0 : i32
    return %c0_i32, %c0_i32_0 : i32, i32
  }
  func.func @transform_1(%arg0: i32) -> (i32, i32) {
    %c0_i32 = arith.constant 0 : i32
    %c0_i32_0 = arith.constant 0 : i32
    %c0_i32_1 = arith.constant 0 : i32
    return %c0_i32, %c0_i32_0 : i32, i32
  }
  func.func @transform_2(%arg0: i32) -> (i32, i32) {
    %c0_i32 = arith.constant 0 : i32
    %c0_i32_0 = arith.constant 0 : i32
    %c0_i32_1 = arith.constant 0 : i32
    return %c0_i32, %c0_i32_0 : i32, i32
  }
}

module attributes {stable_mosaic.version = 11 : i64} {
  func.func @_bpr_loss_kernel(%arg0: i32, %arg1: i32, %arg2: memref<16x128xf32, #tpu.memory_space<vmem>>, %arg3: memref<16x128xf32, #tpu.memory_space<vmem>>, %arg4: memref<1x16x128xf32, #tpu.memory_space<vmem>>, %arg5: memref<1x128xf32, #tpu.memory_space<vmem>>, %arg6: memref<1xf32, #tpu.memory_space<smem>>) attributes {dimension_semantics = [#tpu.dimension_semantics<arbitrary>, #tpu.dimension_semantics<arbitrary>], iteration_bounds = array<i64: 1, 2>, scalar_prefetch = 0 : i64, scratch_operands = 1 : i64, tpu.core_type = #tpu.core_type<tc>, window_params = [{transform_indices = @transform_0, window_bounds = array<i64: 16, 128>}, {transform_indices = @transform_1, window_bounds = array<i64: 16, 128>}, {transform_indices = @transform_2, window_bounds = array<i64: 1, 16, 128>}, {pipeline_mode = #tpu.pipeline_mode<synchronous>, transform_indices = @transform_3, window_bounds = array<i64: 1, 128>}]} {
    %c0_i32 = arith.constant 0 : i32
    %0 = arith.cmpi eq, %arg0, %c0_i32 : i32
    %c0_i32_0 = arith.constant 0 : i32
    %1 = arith.cmpi eq, %arg1, %c0_i32_0 : i32
    %2 = arith.andi %0, %1 : i1
    %3 = arith.extui %2 : i1 to i32
    %c0_i32_1 = arith.constant 0 : i32
    %4 = arith.cmpi ne, %3, %c0_i32_1 : i32
    scf.if %4 {
      %cst_16 = arith.constant 0.000000e+00 : f32
      %c0_17 = arith.constant 0 : index
      %41 = memref.load %arg6[%c0_17] : memref<1xf32, #tpu.memory_space<smem>>
      memref.store %cst_16, %arg6[%c0_17] : memref<1xf32, #tpu.memory_space<smem>>
    } else {
    }
    %c0 = arith.constant 0 : index
    %c0_2 = arith.constant 0 : index
    %5 = vector.load %arg2[%c0, %c0_2] : memref<16x128xf32, #tpu.memory_space<vmem>>, vector<16x128xf32>
    %c0_3 = arith.constant 0 : index
    %c0_4 = arith.constant 0 : index
    %6 = vector.load %arg3[%c0_3, %c0_4] : memref<16x128xf32, #tpu.memory_space<vmem>>, vector<16x128xf32>
    %c0_5 = arith.constant 0 : index
    %c0_6 = arith.constant 0 : index
    %c0_7 = arith.constant 0 : index
    %7 = vector.load %arg4[%c0_5, %c0_6, %c0_7] : memref<1x16x128xf32, #tpu.memory_space<vmem>>, vector<1x16x128xf32>
    %8 = vector.shape_cast %7 : vector<1x16x128xf32> to vector<16x128xf32>
    %9 = arith.subf %6, %8 : vector<16x128xf32>
    %10 = arith.mulf %5, %9 : vector<16x128xf32>
    %cst = arith.constant dense<0.000000e+00> : vector<16xf32>
    %11 = vector.multi_reduction <add>, %10, %cst [1] : vector<16x128xf32> to vector<16xf32>
    %12 = vector.shape_cast %11 : vector<16xf32> to vector<16x1xf32>
    %c0_8 = arith.constant 0 : index
    %13 = memref.load %arg6[%c0_8] : memref<1xf32, #tpu.memory_space<smem>>
    %cst_9 = arith.constant 0.000000e+00 : f32
    %14 = vector.broadcast %cst_9 : f32 to vector<16x1xf32>
    %15 = arith.subf %14, %12 : vector<16x1xf32>
    %cst_10 = arith.constant 0.000000e+00 : f32
    %16 = vector.broadcast %cst_10 : f32 to vector<16x1xf32>
    %17 = arith.maximumf %15, %16 : vector<16x1xf32>
    %18 = vector.broadcast %cst_10 : f32 to vector<16x1xf32>
    %19 = arith.subf %15, %18 : vector<16x1xf32>
    %20 = arith.cmpf one, %19, %19 : vector<16x1xf32>
    %21 = vector.broadcast %cst_10 : f32 to vector<16x1xf32>
    %22 = arith.addf %15, %21 : vector<16x1xf32>
    %23 = math.absf %19 : vector<16x1xf32>
    %cst_11 = arith.constant 0.000000e+00 : f32
    %24 = vector.broadcast %cst_11 : f32 to vector<16x1xf32>
    %25 = arith.subf %24, %23 : vector<16x1xf32>
    %26 = math.exp %25 : vector<16x1xf32>
    %27 = math.log1p %26 : vector<16x1xf32>
    %28 = arith.addf %17, %27 : vector<16x1xf32>
    %29 = arith.select %20, %22, %28 : vector<16x1xi1>, vector<16x1xf32>
    %30 = vector.shape_cast %29 : vector<16x1xf32> to vector<1x16x1xf32>
    %cst_12 = arith.constant dense<0.000000e+00> : vector<1xf32>
    %31 = vector.multi_reduction <add>, %30, %cst_12 [1, 2] : vector<1x16x1xf32> to vector<1xf32>
    %32 = vector.shape_cast %31 : vector<1xf32> to vector<1x1x1xf32>
    %33 = vector.extract %32[0, 0, 0] : f32 from vector<1x1x1xf32>
    %34 = arith.addf %13, %33 : f32
    %c0_13 = arith.constant 0 : index
    %35 = memref.load %arg6[%c0_13] : memref<1xf32, #tpu.memory_space<smem>>
    memref.store %34, %arg6[%c0_13] : memref<1xf32, #tpu.memory_space<smem>>
    %c0_i32_14 = arith.constant 0 : i32
    %36 = arith.cmpi eq, %arg0, %c0_i32_14 : i32
    %c1_i32 = arith.constant 1 : i32
    %37 = arith.cmpi eq, %arg1, %c1_i32 : i32
    %38 = arith.andi %36, %37 : i1
    %39 = arith.extui %38 : i1 to i32
    %c0_i32_15 = arith.constant 0 : i32
    %40 = arith.cmpi ne, %39, %c0_i32_15 : i32
    scf.if %40 {
      %c0_16 = arith.constant 0 : index
      %41 = memref.load %arg6[%c0_16] : memref<1xf32, #tpu.memory_space<smem>>
      %cst_17 = arith.constant 3.125000e-02 : f32
      %42 = arith.mulf %41, %cst_17 : f32
      %43 = vector.broadcast %42 : f32 to vector<1x128xf32>
      %c0_18 = arith.constant 0 : index
      %c0_19 = arith.constant 0 : index
      %44 = vector.load %arg5[%c0_18, %c0_19] : memref<1x128xf32, #tpu.memory_space<vmem>>, vector<1x128xf32>
      tpu.vector_store %arg5[%c0_18, %c0_19], %43 {strides = array<i32>} : memref<1x128xf32, #tpu.memory_space<vmem>>, vector<1x128xf32>,
    } else {
    }
    return
  }
  func.func @transform_0(%arg0: i32, %arg1: i32) -> (i32, i32) {
    %c0_i32 = arith.constant 0 : i32
    %c0_i32_0 = arith.constant 0 : i32
    return %arg0, %c0_i32 : i32, i32
  }
  func.func @transform_1(%arg0: i32, %arg1: i32) -> (i32, i32) {
    %c0_i32 = arith.constant 0 : i32
    %c0_i32_0 = arith.constant 0 : i32
    return %arg0, %c0_i32 : i32, i32
  }
  func.func @transform_2(%arg0: i32, %arg1: i32) -> (i32, i32, i32) {
    %c0_i32 = arith.constant 0 : i32
    %c0_i32_0 = arith.constant 0 : i32
    return %arg1, %arg0, %c0_i32 : i32, i32, i32
  }
  func.func @transform_3(%arg0: i32, %arg1: i32) -> (i32, i32) {
    %c0_i32 = arith.constant 0 : i32
    %c0_i32_0 = arith.constant 0 : i32
    %c0_i32_1 = arith.constant 0 : i32
    return %c0_i32, %c0_i32_0 : i32, i32
  }
}

</mosaic_0001>

<llo_original>
// kernel: lightgcn_forward.3
$region0: #{lightgcn_forward.3}
  #allocation0 [shape = 'u32[]', space=smem, size = 0x4, offset = 0x4, fixed_abs, tag = 'smem constant byte address 0x4 - core index']
  #allocation1 [shape = 'u32[144,128]{1,0:T(1,128)}', space=vmem, size = 0x12000, scoped, tag = 'internal scratch']
  #allocation2 [shape = 'f32[1]{0:T(128)}', space=smem, size = 0x200, scoped, tag = 'scratch operand']
  %s0 = inlined_call_operand.vmem [shape: f32[16,128], index: 0, kind: input, shape index: {}]
  %s1 = inlined_call_operand.vmem [shape: f32[16,128], index: 1, kind: input, shape index: {}]
  %s2 = inlined_call_operand.vmem [shape: f32[2,16,128], index: 2, kind: input, shape index: {}]
  %s3 = inlined_call_operand.hbm [shape: f32[1,128], index: 3, kind: output, shape index: {}]
  %s4 = sld [smem:[#allocation0]]
  $region53: #{lightgcn_forward.3} parent=0
    _
  %s6 = ssub.s32 1, %s4
  %s7 = scalar_select 0, %s6, %s4
  $region1: #{lightgcn_forward.3} parent=0
    #allocation3 [shape = 'u8[512]{0}', space=vmem, size = 0x400, scoped, tag = 'output window, operand 0, single buffered']
    #allocation4 [shape = 's32[2]{0}', space=sflag, size = 0x8, scoped, tag = 'scoped memory for lightgcn_forward.3']
    %8 = vsyncpa [#allocation4], 0
    loop: start=0, step=1, limit=4
    $region2: #{lightgcn_forward.3} parent=1 // loop_pre_header
      _
    $region3: #{lightgcn_forward.3} parent=1 // loop_header
      %s10 = sphi 0, %s14
      %p11 = scmp.ge.s32.totalorder %s10, 4
      %s17 = sphi 0, %s29
      %s18 = sphi 0, %s25
      %s19 = sphi 0, %s17
      %s20 = sphi 0, %s18
      %s21 = sphi 0, %s19
      %s22 = sphi 0, %s20
      %s32 = sphi 0, %s34
      %s35 = sphi 0, %s32
      %s36 = sphi 0, %s35
      %s52 = sphi 0, %s36
      %s58 = sphi 0, %s60
      %s61 = sphi 0, %s58
      %s62 = sphi 0, %s61
      %s78 = sphi 0, %s62
      %s86 = sphi 0, %s88
      %s89 = sphi 0, %s86
      %s90 = sphi 0, %s89
      %s106 = sphi 0, %s90
      %s110 = sphi 0, %s110
      %s112 = sphi 0, %s110
      %s113 = sphi 0, %s112
      %s127 = sphi 0, %s113
    $region4: #{lightgcn_forward.3} parent=1 // loop_header_branch
      %13 = sbr.rel (%p11) target = $region8
    $region5: #{lightgcn_forward.3} parent=1 // loop_body
      %s15 = ssub.s32 %s10, 1
      %s16 = ssub.s32 %s10, 2
      %s23 = sadd.s32 1, %s18
      %p24 = scmp.ge.s32.totalorder %s23, 2
      %s25 = scalar_select %p24, 0, %s23
      %s26 = sadd.s32 1, %s17
      %s27 = scalar_select %p24, %s26, %s17
      %p28 = scmp.ge.s32.totalorder %s27, 1
      %s29 = scalar_select %p28, 0, %s27
      %s30 = ssub.s32 %s17, %s29
      %p31 = scmp.eq.s32.totalorder %s30, 0
      %s33 = sadd.s32 %s32, 1
      %s34 = scalar_select %p31, %s32, %s33
      %p37 = pneg %p31
      %p38 = scmp.eq.s32.totalorder %s10, 1
      %p39 = por %p37, %p38
      %p40 = scmp.ne.s32.totalorder %s32, %s35
      %p41 = scmp.eq.s32.totalorder %s10, 0
      %p42 = por %p40, %p41
      %p43 = scmp.ne.s32.totalorder %s32, %s35
      %p44 = scmp.eq.s32.totalorder %s15, 1
      %p45 = por %p43, %p44
      %p46 = scmp.ne.s32.totalorder %s35, %s36
      %p47 = scmp.eq.s32.totalorder %s15, 0
      %p48 = por %p46, %p47
      %p49 = scmp.ne.s32.totalorder %s35, %s36
      %p50 = scmp.eq.s32.totalorder %s16, 1
      %p51 = por %p49, %p50
      %p53 = scmp.ne.s32.totalorder %s36, %s52
      %p54 = scmp.eq.s32.totalorder %s16, 0
      %p55 = por %p53, %p54
      %s56 = ssub.s32 %s17, %s29
      %p57 = scmp.eq.s32.totalorder %s56, 0
      %s59 = sadd.s32 %s58, 1
      %s60 = scalar_select %p57, %s58, %s59
      %p63 = pneg %p57
      %p64 = scmp.eq.s32.totalorder %s10, 1
      %p65 = por %p63, %p64
      %p66 = scmp.ne.s32.totalorder %s58, %s61
      %p67 = scmp.eq.s32.totalorder %s10, 0
      %p68 = por %p66, %p67
      %p69 = scmp.ne.s32.totalorder %s58, %s61
      %p70 = scmp.eq.s32.totalorder %s15, 1
      %p71 = por %p69, %p70
      %p72 = scmp.ne.s32.totalorder %s61, %s62
      %p73 = scmp.eq.s32.totalorder %s15, 0
      %p74 = por %p72, %p73
      %p75 = scmp.ne.s32.totalorder %s61, %s62
      %p76 = scmp.eq.s32.totalorder %s16, 1
      %p77 = por %p75, %p76
      %p79 = scmp.ne.s32.totalorder %s62, %s78
      %p80 = scmp.eq.s32.totalorder %s16, 0
      %p81 = por %p79, %p80
      %s82 = ssub.s32 %s18, %s25
      %s83 = ssub.s32 %s17, %s29
      %s84 = sor.u32 %s82, %s83
      %p85 = scmp.eq.s32.totalorder %s84, 0
      %s87 = sadd.s32 %s86, 1
      %s88 = scalar_select %p85, %s86, %s87
      %p91 = pneg %p85
      %p92 = scmp.eq.s32.totalorder %s10, 1
      %p93 = por %p91, %p92
      %p94 = scmp.ne.s32.totalorder %s86, %s89
      %p95 = scmp.eq.s32.totalorder %s10, 0
      %p96 = por %p94, %p95
      %p97 = scmp.ne.s32.totalorder %s86, %s89
      %p98 = scmp.eq.s32.totalorder %s15, 1
      %p99 = por %p97, %p98
      %p100 = scmp.ne.s32.totalorder %s89, %s90
      %p101 = scmp.eq.s32.totalorder %s15, 0
      %p102 = por %p100, %p101
      %p103 = scmp.ne.s32.totalorder %s89, %s90
      %p104 = scmp.eq.s32.totalorder %s16, 1
      %p105 = por %p103, %p104
      %p107 = scmp.ne.s32.totalorder %s90, %s106
      %p108 = scmp.eq.s32.totalorder %s16, 0
      %p109 = por %p107, %p108
      %s111 = sadd.s32 %s110, 1
      %p114 = scmp.eq.s32.totalorder %s10, 1
      %p115 = scmp.ne.s32.totalorder %s110, %s112
      %p116 = scmp.eq.s32.totalorder %s10, 0
      %p117 = por %p115, %p116
      %p118 = scmp.ne.s32.totalorder %s110, %s112
      %p119 = scmp.eq.s32.totalorder %s15, 1
      %p120 = por %p118, %p119
      %p121 = scmp.ne.s32.totalorder %s112, %s113
      %p122 = scmp.eq.s32.totalorder %s15, 0
      %p123 = por %p121, %p122
      %p124 = scmp.ne.s32.totalorder %s112, %s113
      %p125 = scmp.eq.s32.totalorder %s16, 1
      %p126 = por %p124, %p125
      %p128 = scmp.ne.s32.totalorder %s113, %s127
      %p129 = scmp.eq.s32.totalorder %s16, 0
      %p130 = por %p128, %p129
      %p131 = scmp.le.s32.totalorder 1, %s10
      %p132 = scmp.lt.s32.totalorder %s10, 3
      %p133 = pnand %p131, %p132
      %p134 = pneg %p133
      // Predicated region
      $region9: #{lightgcn_forward.3} parent=5 // pred_check
        _
      $region10: #{lightgcn_forward.3} parent=5 // pred_check_branch
        %136 = sbr.rel (%p133) target = $region12
      $region11: #{lightgcn_forward.3} parent=5 // pred_region
        %s137 = ssub.s32 %s10, 1
        // Predicated region
        $region13: #{lightgcn_forward.3} parent=11 // pred_check
          %p138 = pneg %p48
        $region14: #{lightgcn_forward.3} parent=11 // pred_check_branch
          %140 = sbr.rel (%p138) target = $region16
        $region15: #{lightgcn_forward.3} parent=11 // pred_region
          %s141 = smul.u32 2, %s19
          %p142 = scmp.lt.s32.totalorder %s141, 1
          %s143 = scalar_select %p142, %s141, 1
          %s144 = smul.addr %s143, 8
          %s145 = scalar_lea.vmem %s0, %s144
          %s146 = smul.u32 2, %s19
        $region16: #{lightgcn_forward.3} parent=11 // pred_fallthru
          _
        // Predicated region
        $region17: #{lightgcn_forward.3} parent=11 // pred_check
          %p147 = pneg %p74
        $region18: #{lightgcn_forward.3} parent=11 // pred_check_branch
          %149 = sbr.rel (%p147) target = $region20
        $region19: #{lightgcn_forward.3} parent=11 // pred_region
          %s150 = smul.u32 2, %s19
          %p151 = scmp.lt.s32.totalorder %s150, 1
          %s152 = scalar_select %p151, %s150, 1
          %s153 = smul.addr %s152, 8
          %s154 = scalar_lea.vmem %s1, %s153
          %s155 = smul.u32 2, %s19
        $region20: #{lightgcn_forward.3} parent=11 // pred_fallthru
          _
      $region12: #{lightgcn_forward.3} parent=5 // pred_fallthru
        _
      %p156 = scmp.lt.s32.totalorder %s10, 2
      // Predicated region
      $region21: #{lightgcn_forward.3} parent=5 // pred_check
        %p157 = pneg %p156
      $region22: #{lightgcn_forward.3} parent=5 // pred_check_branch
        %159 = sbr.rel (%p157) target = $region24
      $region23: #{lightgcn_forward.3} parent=5 // pred_region
        // Predicated region
        $region25: #{lightgcn_forward.3} parent=23 // pred_check
          %p160 = pneg %p96
        $region26: #{lightgcn_forward.3} parent=23 // pred_check_branch
          %162 = sbr.rel (%p160) target = $region28
        $region27: #{lightgcn_forward.3} parent=23 // pred_region
          %s163 = smul.u32 2, %s17
          %p164 = scmp.lt.s32.totalorder %s18, 1
          %s165 = scalar_select %p164, %s18, 1
          %p166 = scmp.lt.s32.totalorder %s163, 1
          %s167 = scalar_select %p166, %s163, 1
          %s168 = smul.addr %s165, 2
          %s169 = sadd.s32 %s167, %s168
          %s170 = smul.addr %s169, 8
          %s171 = scalar_lea.vmem %s2, %s170
          %s172 = smul.u32 2, %s17
        $region28: #{lightgcn_forward.3} parent=23 // pred_fallthru
          _
      $region24: #{lightgcn_forward.3} parent=5 // pred_fallthru
        _
      %p173 = scmp.le.s32.totalorder 1, %s10
      %p174 = scmp.lt.s32.totalorder %s10, 3
      %p175 = pnand %p173, %p174
      %p176 = pneg %p175
      // Predicated region
      $region29: #{lightgcn_forward.3} parent=5 // pred_check
        _
      $region30: #{lightgcn_forward.3} parent=5 // pred_check_branch
        %178 = sbr.rel (%p175) target = $region32
      $region31: #{lightgcn_forward.3} parent=5 // pred_region
        %s179 = ssub.s32 %s10, 1
        %s180 = smul.u32 2, %s19
        %p181 = scmp.lt.s32.totalorder %s180, 1
        %s182 = scalar_select %p181, %s180, 1
        %s183 = smul.addr %s182, 8
        %s184 = scalar_lea.vmem %s0, %s183
        %p185 = pneg %p48
        %p186 = pneg %p45
        %s187 = smul.u32 2, %s19
        %p188 = scmp.lt.s32.totalorder %s187, 1
        %s189 = scalar_select %p188, %s187, 1
        %s190 = smul.addr %s189, 8
        %s191 = scalar_lea.vmem %s1, %s190
        %p192 = pneg %p74
        %p193 = pneg %p71
        %s194 = smul.u32 2, %s19
        %p195 = scmp.lt.s32.totalorder %s20, 1
        %s196 = scalar_select %p195, %s20, 1
        %p197 = scmp.lt.s32.totalorder %s194, 1
        %s198 = scalar_select %p197, %s194, 1
        %s199 = smul.addr %s196, 2
        %s200 = sadd.s32 %s198, %s199
        %s201 = smul.addr %s200, 8
        %s202 = scalar_lea.vmem %s2, %s201
        %p203 = pneg %p102
        %p204 = pneg %p99
        %p205 = pneg %p123
        %p206 = pneg %p120
        %s207 = smul.u32 2, %s19
        %p208 = scmp.lt.s32.totalorder %s207, 1
        %s209 = scalar_select %p208, %s207, 1
        %s210 = smul.addr %s209, 8
        %s211 = scalar_lea.vmem %s0, %s210
        %s212 = smul.u32 2, %s19
        %s213 = smul.u32 2, %s19
        %p214 = scmp.lt.s32.totalorder %s213, 1
        %s215 = scalar_select %p214, %s213, 1
        %s216 = smul.addr %s215, 8
        %s217 = scalar_lea.vmem %s1, %s216
        %s218 = smul.u32 2, %s19
        %s219 = smul.u32 2, %s19
        %p220 = scmp.lt.s32.totalorder %s20, 1
        %s221 = scalar_select %p220, %s20, 1
        %p222 = scmp.lt.s32.totalorder %s219, 1
        %s223 = scalar_select %p222, %s219, 1
        %s224 = smul.addr %s221, 2
        %s225 = sadd.s32 %s223, %s224
        %s226 = smul.addr %s225, 8
        %s227 = scalar_lea.vmem %s2, %s226
        %s228 = smul.u32 2, %s19
        %p229 = scmp.eq.s32.totalorder %s19, 0
        %p230 = scmp.eq.s32.totalorder %s20, 0
        %p231 = pnand %p229, %p230
        %p232 = pneg %p231
        // Predicated region
        $region33: #{lightgcn_forward.3} parent=31 // pred_check
          _
        $region34: #{lightgcn_forward.3} parent=31 // pred_check_branch
          %234 = sbr.rel (%p231) target = $region36
        $region35: #{lightgcn_forward.3} parent=31 // pred_region
          %s235 = scalar_lea.smem [#allocation2], 0
          %236 = sst [smem:[%s235]] 0.0
        $region36: #{lightgcn_forward.3} parent=31 // pred_fallthru
          _
        %v237 = vld [vmem:[%s211] sm:$0xff]
        %v238 = vld [vmem:[%s211 + $0x8] sm:$0xff]
        %v239 = vld [vmem:[%s217] sm:$0xff]
        %v240 = vld [vmem:[%s217 + $0x8] sm:$0xff]
        %v241 = vld [vmem:[%s227] sm:$0xff]
        %v242 = vld [vmem:[%s227 + $0x8] sm:$0xff]
        %v243 = vsub.f32 %v239, %v241
        %v244 = vsub.f32 %v240, %v242
        %v245 = vmul.f32 %v237, %v243
        %v246 = vmul.f32 %v238, %v244
        %247 = vadd.xlane.f32.xlu0 %v245
        %v248 = vpop.xlane.xlu0 %247
        %249 = vadd.xlane.f32.xlu0 %v246
        %v250 = vpop.xlane.xlu0 %249
        %s251 = sld [smem:[#allocation2]]
        %v252 = vsub.f32 0.0, %v248
        %v253 = vsub.f32 0.0, %v250
        %v254 = vmax.f32 %v252, 0.0
        %v255 = vmax.f32 %v253, 0.0
        %vm256 = vcmp.ne.f32.partialorder %v252, %v252
        %vm257 = vcmp.ne.f32.partialorder %v253, %v253
        %v258 = vadd.f32 %v252, 0.0
        %v259 = vadd.f32 %v253, 0.0
        %v260 = vand.u32 2147483647, %v252
        %v261 = vand.u32 2147483647, %v253
        %v262 = vsub.f32 0.0, %v260
        %v263 = vsub.f32 0.0, %v261
        %v264 = vmul.f32 %v262, 1.442695
        %v265 = vpow.pop %v264
        %v266 = vmul.f32 %v263, 1.442695
        %v267 = vpow.pop %v266
        %v268 = vadd.f32 %v265, 1.0
        %v269 = vlog2.pop %v268
        %v270 = vmul.f32 %v269, 0.6931472
        %v271 = vmul.f32 -0.5, %v265
        %v272 = vadd.f32 %v271, 1.0
        %v273 = vmul.f32 %v272, %v265
        %v274 = vand.u32 2147483647, %v265
        %vm275 = vcmp.lt.f32.partialorder %v274, 0.0004427343
        %v276 = vsel %vm275, %v273, %v270
        %v277 = vadd.f32 %v267, 1.0
        %v278 = vlog2.pop %v277
        %v279 = vmul.f32 %v278, 0.6931472
        %v280 = vmul.f32 -0.5, %v267
        %v281 = vadd.f32 %v280, 1.0
        %v282 = vmul.f32 %v281, %v267
        %v283 = vand.u32 2147483647, %v267
        %vm284 = vcmp.lt.f32.partialorder %v283, 0.0004427343
        %v285 = vsel %vm284, %v282, %v279
        %v286 = vadd.f32 %v254, %v276
        %v287 = vadd.f32 %v255, %v285
        %v288 = vsel %vm256, %v258, %v286
        %v289 = vsel %vm257, %v259, %v287
        %vm290 = vcmask 7168
        %v291 = vsel %vm290, %v288, 0.0
        %v292 = vsel %vm290, %v289, 0.0
        %v293 = vadd.f32 %v291, %v292
        %294 = vadd.xlane.f32.xlu0 %v293
        %v295 = vpop.xlane.xlu0 %294
        %v296 = vrot.slane %v295, 4
        %v297 = vadd.f32 %v295, %v296
        %v298 = vrot.slane %v297, 2
        %v299 = vadd.f32 %v297, %v298
        %v300 = vrot.slane %v299, 1
        %v301 = vadd.f32 %v299, %v300
        %s302 = vtos %v301
        %s303 = sadd.f32 %s251, %s302
        %s304 = scalar_lea.smem [#allocation2], 0
        %305 = sst [smem:[%s304]] %s303
        %p306 = scmp.eq.s32.totalorder %s20, 1
        %p307 = pnand %p229, %p306
        %p308 = pneg %p307
        // Predicated region
        $region37: #{lightgcn_forward.3} parent=31 // pred_check
          _
        $region38: #{lightgcn_forward.3} parent=31 // pred_check_branch
          %310 = sbr.rel (%p307) target = $region40
        $region39: #{lightgcn_forward.3} parent=31 // pred_region
          %s311 = sld [smem:[#allocation2]]
          %s312 = smul.f32 %s311, 0.03125
          %v313 = vstv %s312
          %314 = vst [vmem:[#allocation3] sm:$0x1] %v313
        $region40: #{lightgcn_forward.3} parent=31 // pred_fallthru
          _
        // Predicated region
        $region41: #{lightgcn_forward.3} parent=31 // pred_check
          %p315 = pneg %p120
        $region42: #{lightgcn_forward.3} parent=31 // pred_check_branch
          %317 = sbr.rel (%p315) target = $region44
        $region43: #{lightgcn_forward.3} parent=31 // pred_region
          %s319 = ssub.s32 16, 16
          %320 = vsyncadd [#allocation4], %s319
          %s322 = sshll.u32 [#allocation3], 4
          %s323 = int_to_ptr.vmem [resolvable:$true] %s322
          %325 = dma.vmem_to_hbm [thread:$0]  %s323, 16, %s3, [#allocation4]
        $region44: #{lightgcn_forward.3} parent=31 // pred_fallthru
          _
        // Predicated region
        $region45: #{lightgcn_forward.3} parent=31 // pred_check
          %p326 = pneg %p120
        $region46: #{lightgcn_forward.3} parent=31 // pred_check_branch
          %328 = sbr.rel (%p326) target = $region48
        $region47: #{lightgcn_forward.3} parent=31 // pred_region
          %329 = dma.done [#allocation4], 16
        $region48: #{lightgcn_forward.3} parent=31 // pred_fallthru
          _
      $region32: #{lightgcn_forward.3} parent=5 // pred_fallthru
        _
      %p330 = scmp.le.s32.totalorder 2, %s10
      // Predicated region
      $region49: #{lightgcn_forward.3} parent=5 // pred_check
        %p331 = pneg %p330
      $region50: #{lightgcn_forward.3} parent=5 // pred_check_branch
        %333 = sbr.rel (%p331) target = $region52
      $region51: #{lightgcn_forward.3} parent=5 // pred_region
        %s334 = ssub.s32 %s10, 2
      $region52: #{lightgcn_forward.3} parent=5 // pred_fallthru
        _
    $region6: #{lightgcn_forward.3} parent=1 // loop_footer
      %s14 = sadd.s32 1, %s10
    $region7: #{lightgcn_forward.3} parent=1 // loop_footer_branch
      %9 = sbr.rel target = $region3
    $region8: #{lightgcn_forward.3} parent=1 // loop_exit
      _
    %335 = vsyncpa [#allocation4], 1
    %s336 = scalar_lea.sflag [#allocation4], 1
    %337 = vsyncpa %s336, 1

// kernel: lightgcn_forward.2
$region0: #{lightgcn_forward.2}
  #allocation0 [shape = 'u32[]', space=smem, size = 0x4, offset = 0x4, fixed_abs, tag = 'smem constant byte address 0x4 - core index']
  #allocation1 [shape = 'u32[144,128]{1,0:T(1,128)}', space=vmem, size = 0x12000, scoped, tag = 'internal scratch']
  #allocation2 [shape = 'bf16[128,128]{1,0:T(16,128)(2,1)}', space=vmem, size = 0x8000, scoped, tag = 'scratch operand']
  %s0 = inlined_call_operand.vmem [shape: bf16[128,128], index: 0, kind: input, shape index: {}]
  %s1 = inlined_call_operand.vmem [shape: f32[128,128], index: 1, kind: input, shape index: {}]
  %s2 = inlined_call_operand.vmem [shape: f32[128,128], index: 2, kind: output, shape index: {}]
  %s3 = sld [smem:[#allocation0]]
  $region18: #{lightgcn_forward.2} parent=0
    _
  %s5 = ssub.s32 1, %s3
  %s6 = scalar_select 0, %s5, %s3
  // Predicated region
  $region2: #{lightgcn_forward.2} parent=0 // pred_check
    _
  $region3: #{lightgcn_forward.2} parent=0 // pred_check_branch
    %8 = sbr.rel (0) target = $region5
  $region4: #{lightgcn_forward.2} parent=0 // pred_region
    _
  $region5: #{lightgcn_forward.2} parent=0 // pred_fallthru
    _
  // Predicated region
  $region6: #{lightgcn_forward.2} parent=0 // pred_check
    _
  $region7: #{lightgcn_forward.2} parent=0 // pred_check_branch
    %10 = sbr.rel (0) target = $region9
  $region8: #{lightgcn_forward.2} parent=0 // pred_region
    _
  $region9: #{lightgcn_forward.2} parent=0 // pred_fallthru
    _
  %v12 = vld [vmem:[%s1] sm:$0xff]
  %v13 = vld [vmem:[%s1 + $0x8] sm:$0xff]
  %v14 = vld [vmem:[%s1 + $0x10] sm:$0xff]
  %v15 = vld [vmem:[%s1 + $0x18] sm:$0xff]
  %v16 = vld [vmem:[%s1 + $0x20] sm:$0xff]
  %v17 = vld [vmem:[%s1 + $0x28] sm:$0xff]
  %v18 = vld [vmem:[%s1 + $0x30] sm:$0xff]
  %v19 = vld [vmem:[%s1 + $0x38] sm:$0xff]
  %v20 = vld [vmem:[%s1 + $0x40] sm:$0xff]
  %v21 = vld [vmem:[%s1 + $0x48] sm:$0xff]
  %v22 = vld [vmem:[%s1 + $0x50] sm:$0xff]
  %v23 = vld [vmem:[%s1 + $0x58] sm:$0xff]
  %v24 = vld [vmem:[%s1 + $0x60] sm:$0xff]
  %v25 = vld [vmem:[%s1 + $0x68] sm:$0xff]
  %v26 = vld [vmem:[%s1 + $0x70] sm:$0xff]
  %v27 = vld [vmem:[%s1 + $0x78] sm:$0xff]
  %28 = vst [vmem:[%s2] sm:$0xff] %v12
  %29 = vst [vmem:[%s2 + $0x8] sm:$0xff] %v13
  %30 = vst [vmem:[%s2 + $0x10] sm:$0xff] %v14
  %31 = vst [vmem:[%s2 + $0x18] sm:$0xff] %v15
  %32 = vst [vmem:[%s2 + $0x20] sm:$0xff] %v16
  %33 = vst [vmem:[%s2 + $0x28] sm:$0xff] %v17
  %34 = vst [vmem:[%s2 + $0x30] sm:$0xff] %v18
  %35 = vst [vmem:[%s2 + $0x38] sm:$0xff] %v19
  %36 = vst [vmem:[%s2 + $0x40] sm:$0xff] %v20
  %37 = vst [vmem:[%s2 + $0x48] sm:$0xff] %v21
  %38 = vst [vmem:[%s2 + $0x50] sm:$0xff] %v22
  %39 = vst [vmem:[%s2 + $0x58] sm:$0xff] %v23
  %40 = vst [vmem:[%s2 + $0x60] sm:$0xff] %v24
  %41 = vst [vmem:[%s2 + $0x68] sm:$0xff] %v25
  %42 = vst [vmem:[%s2 + $0x70] sm:$0xff] %v26
  %43 = vst [vmem:[%s2 + $0x78] sm:$0xff] %v27
  %v44 = vpack.c.bf16 %v13, %v12
  %v45 = vpack.c.bf16 %v15, %v14
  %v46 = vpack.c.bf16 %v17, %v16
  %v47 = vpack.c.bf16 %v19, %v18
  %v48 = vpack.c.bf16 %v21, %v20
  %v49 = vpack.c.bf16 %v23, %v22
  %v50 = vpack.c.bf16 %v25, %v24
  %v51 = vpack.c.bf16 %v27, %v26
  %52 = vst [vmem:[#allocation2] sm:$0xff] %v44
  %53 = vst [vmem:[#allocation2 + $0x8] sm:$0xff] %v45
  %54 = vst [vmem:[#allocation2 + $0x10] sm:$0xff] %v46
  %55 = vst [vmem:[#allocation2 + $0x18] sm:$0xff] %v47
  %56 = vst [vmem:[#allocation2 + $0x20] sm:$0xff] %v48
  %57 = vst [vmem:[#allocation2 + $0x28] sm:$0xff] %v49
  %58 = vst [vmem:[#allocation2 + $0x30] sm:$0xff] %v50
  %59 = vst [vmem:[#allocation2 + $0x38] sm:$0xff] %v51
  %v60 = vld [vmem:[%s0] sm:$0xf]
  %v61 = vld [vmem:[%s0 + $0x4] sm:$0xf]
  %v62 = vld [vmem:[%s0 + $0x8] sm:$0xf]
  %v63 = vld [vmem:[%s0 + $0xc] sm:$0xf]
  %v64 = vld [vmem:[%s0 + $0x10] sm:$0xf]
  %v65 = vld [vmem:[%s0 + $0x14] sm:$0xf]
  %v66 = vld [vmem:[%s0 + $0x18] sm:$0xf]
  %v67 = vld [vmem:[%s0 + $0x1c] sm:$0xf]
  %v68 = vld [vmem:[%s0 + $0x20] sm:$0xf]
  %v69 = vld [vmem:[%s0 + $0x24] sm:$0xf]
  %v70 = vld [vmem:[%s0 + $0x28] sm:$0xf]
  %v71 = vld [vmem:[%s0 + $0x2c] sm:$0xf]
  %v72 = vld [vmem:[%s0 + $0x30] sm:$0xf]
  %v73 = vld [vmem:[%s0 + $0x34] sm:$0xf]
  %v74 = vld [vmem:[%s0 + $0x38] sm:$0xf]
  %v75 = vld [vmem:[%s0 + $0x3c] sm:$0xf]
  %v76 = vld [vmem:[#allocation2] sm:$0xff]
  %v77 = vld [vmem:[#allocation2 + $0x8] sm:$0xff]
  %v78 = vld [vmem:[#allocation2 + $0x10] sm:$0xff]
  %v79 = vld [vmem:[#allocation2 + $0x18] sm:$0xff]
  %v80 = vld [vmem:[#allocation2 + $0x20] sm:$0xff]
  %v81 = vld [vmem:[#allocation2 + $0x28] sm:$0xff]
  %v82 = vld [vmem:[#allocation2 + $0x30] sm:$0xff]
  %v83 = vld [vmem:[#allocation2 + $0x38] sm:$0xff]
  %v100 = vunpack.c.l.b16 %v60
  %v101 = vunpack.c.l.b16 %v61
  %v102 = vunpack.c.l.b16 %v62
  %v103 = vunpack.c.l.b16 %v63
  %v104 = vunpack.c.l.b16 %v64
  %v105 = vunpack.c.l.b16 %v65
  %v106 = vunpack.c.l.b16 %v66
  %v107 = vunpack.c.l.b16 %v67
  %v108 = vunpack.c.l.b16 %v68
  %v109 = vunpack.c.l.b16 %v69
  %v110 = vunpack.c.l.b16 %v70
  %v111 = vunpack.c.l.b16 %v71
  %v112 = vunpack.c.l.b16 %v72
  %v113 = vunpack.c.l.b16 %v73
  %v114 = vunpack.c.l.b16 %v74
  %v115 = vunpack.c.l.b16 %v75
  %v116 = vpack.c.b16 %v101, %v100
  %v117 = vpack.c.b16 %v103, %v102
  %v118 = vpack.c.b16 %v105, %v104
  %v119 = vpack.c.b16 %v107, %v106
  %v120 = vpack.c.b16 %v109, %v108
  %v121 = vpack.c.b16 %v111, %v110
  %v122 = vpack.c.b16 %v113, %v112
  %v123 = vpack.c.b16 %v115, %v114
  %132 = vmatprep.subr.bf16.mxu0 0
  %133 = vmatpush1.bf16.msra.mxu0 %v76
  %134 = vmatprep.subr.bf16.mxu0 0
  %135 = vmatpush1.bf16.msra.mxu0 %v77
  %136 = vmatprep.subr.bf16.mxu0 0
  %137 = vmatpush1.bf16.msra.mxu0 %v78
  %138 = vmatprep.subr.bf16.mxu0 0
  %139 = vmatpush1.bf16.msra.mxu0 %v79
  %140 = vmatprep.subr.bf16.mxu0 0
  %141 = vmatpush1.bf16.msra.mxu0 %v80
  %142 = vmatprep.subr.bf16.mxu0 0
  %143 = vmatpush1.bf16.msra.mxu0 %v81
  %144 = vmatprep.subr.bf16.mxu0 0
  %145 = vmatpush1.bf16.msra.mxu0 %v82
  %146 = vmatprep.subr.bf16.mxu0 0
  %147 = vmatpush1.bf16.msra.mxu0 %v83
  %148 = vmatprep.subr.bf16.mxu0 0
  %149 = vmatpush1.bf16.msra.mxu0 0
  %150 = vmatprep.subr.bf16.mxu0 0
  %151 = vmatpush1.bf16.msra.mxu0 0
  %152 = vmatprep.subr.bf16.mxu0 0
  %153 = vmatpush1.bf16.msra.mxu0 0
  %154 = vmatprep.subr.bf16.mxu0 0
  %155 = vmatpush1.bf16.msra.mxu0 0
  %156 = vmatprep.subr.bf16.mxu0 0
  %157 = vmatpush1.bf16.msra.mxu0 0
  %158 = vmatprep.subr.bf16.mxu0 0
  %159 = vmatpush1.bf16.msra.mxu0 0
  %160 = vmatprep.subr.bf16.mxu0 0
  %161 = vmatpush1.bf16.msra.mxu0 0
  %162 = vmatprep.subr.bf16.mxu0 0
  %163 = vmatpush1.bf16.msra.mxu0 0
  %164 = vmatprep.mubr.bf16.mxu0 0
  %165 = vmatmul.mubr.bf16.gmra.mrb[0].mxu0 %v116
  %v166 = vpop.f32.mrb[0].mxu0
  %v167 = vadd.f32 0.0, %v166
  %v168 = vpop.f32.mrb[0].mxu0
  %v169 = vpop.f32.mrb[0].mxu0
  %v170 = vadd.f32 0.0, %v169
  %v171 = vpop.f32.mrb[0].mxu0
  %172 = vmatprep.mubr.bf16.mxu0 0
  %173 = vmatmul.mubr.bf16.gmra.mrb[0].mxu0 %v117
  %v174 = vpop.f32.mrb[0].mxu0
  %v175 = vadd.f32 0.0, %v174
  %v176 = vpop.f32.mrb[0].mxu0
  %v177 = vpop.f32.mrb[0].mxu0
  %v178 = vadd.f32 0.0, %v177
  %v179 = vpop.f32.mrb[0].mxu0
  %180 = vmatprep.mubr.bf16.mxu0 0
  %181 = vmatmul.mubr.bf16.gmra.mrb[0].mxu0 %v118
  %v182 = vpop.f32.mrb[0].mxu0
  %v183 = vadd.f32 0.0, %v182
  %v184 = vpop.f32.mrb[0].mxu0
  %v185 = vpop.f32.mrb[0].mxu0
  %v186 = vadd.f32 0.0, %v185
  %v187 = vpop.f32.mrb[0].mxu0
  %188 = vmatprep.mubr.bf16.mxu0 0
  %189 = vmatmul.mubr.bf16.gmra.mrb[0].mxu0 %v119
  %v190 = vpop.f32.mrb[0].mxu0
  %v191 = vadd.f32 0.0, %v190
  %v192 = vpop.f32.mrb[0].mxu0
  %v193 = vpop.f32.mrb[0].mxu0
  %v194 = vadd.f32 0.0, %v193
  %v195 = vpop.f32.mrb[0].mxu0
  %196 = vmatprep.mubr.bf16.mxu0 0
  %197 = vmatmul.mubr.bf16.gmra.mrb[0].mxu0 %v120
  %v198 = vpop.f32.mrb[0].mxu0
  %v199 = vadd.f32 0.0, %v198
  %v200 = vpop.f32.mrb[0].mxu0
  %v201 = vpop.f32.mrb[0].mxu0
  %v202 = vadd.f32 0.0, %v201
  %v203 = vpop.f32.mrb[0].mxu0
  %204 = vmatprep.mubr.bf16.mxu0 0
  %205 = vmatmul.mubr.bf16.gmra.mrb[0].mxu0 %v121
  %v206 = vpop.f32.mrb[0].mxu0
  %v207 = vadd.f32 0.0, %v206
  %v208 = vpop.f32.mrb[0].mxu0
  %v209 = vpop.f32.mrb[0].mxu0
  %v210 = vadd.f32 0.0, %v209
  %v211 = vpop.f32.mrb[0].mxu0
  %212 = vmatprep.mubr.bf16.mxu0 0
  %213 = vmatmul.mubr.bf16.gmra.mrb[0].mxu0 %v122
  %v214 = vpop.f32.mrb[0].mxu0
  %v215 = vadd.f32 0.0, %v214
  %v216 = vpop.f32.mrb[0].mxu0
  %v217 = vpop.f32.mrb[0].mxu0
  %v218 = vadd.f32 0.0, %v217
  %v219 = vpop.f32.mrb[0].mxu0
  %220 = vmatprep.mubr.bf16.mxu0 0
  %221 = vmatmul.mubr.bf16.gmra.mrb[0].mxu0 %v123
  %v222 = vpop.f32.mrb[0].mxu0
  %v223 = vadd.f32 0.0, %v222
  %v224 = vpop.f32.mrb[0].mxu0
  %v225 = vpop.f32.mrb[0].mxu0
  %v226 = vadd.f32 0.0, %v225
  %v227 = vpop.f32.mrb[0].mxu0
  %228 = vdwg.mxu0
  %v229 = vld [vmem:[%s2] sm:$0xff]
  %v230 = vld [vmem:[%s2 + $0x8] sm:$0xff]
  %v231 = vld [vmem:[%s2 + $0x10] sm:$0xff]
  %v232 = vld [vmem:[%s2 + $0x18] sm:$0xff]
  %v233 = vld [vmem:[%s2 + $0x20] sm:$0xff]
  %v234 = vld [vmem:[%s2 + $0x28] sm:$0xff]
  %v235 = vld [vmem:[%s2 + $0x30] sm:$0xff]
  %v236 = vld [vmem:[%s2 + $0x38] sm:$0xff]
  %v237 = vld [vmem:[%s2 + $0x40] sm:$0xff]
  %v238 = vld [vmem:[%s2 + $0x48] sm:$0xff]
  %v239 = vld [vmem:[%s2 + $0x50] sm:$0xff]
  %v240 = vld [vmem:[%s2 + $0x58] sm:$0xff]
  %v241 = vld [vmem:[%s2 + $0x60] sm:$0xff]
  %v242 = vld [vmem:[%s2 + $0x68] sm:$0xff]
  %v243 = vld [vmem:[%s2 + $0x70] sm:$0xff]
  %v244 = vld [vmem:[%s2 + $0x78] sm:$0xff]
  %v245 = vadd.f32 %v229, %v167
  %v246 = vadd.f32 %v230, %v170
  %v247 = vadd.f32 %v231, %v175
  %v248 = vadd.f32 %v232, %v178
  %v249 = vadd.f32 %v233, %v183
  %v250 = vadd.f32 %v234, %v186
  %v251 = vadd.f32 %v235, %v191
  %v252 = vadd.f32 %v236, %v194
  %v253 = vadd.f32 %v237, %v199
  %v254 = vadd.f32 %v238, %v202
  %v255 = vadd.f32 %v239, %v207
  %v256 = vadd.f32 %v240, %v210
  %v257 = vadd.f32 %v241, %v215
  %v258 = vadd.f32 %v242, %v218
  %v259 = vadd.f32 %v243, %v223
  %v260 = vadd.f32 %v244, %v226
  %261 = vst [vmem:[%s2] sm:$0xff] %v245
  %262 = vst [vmem:[%s2 + $0x8] sm:$0xff] %v246
  %263 = vst [vmem:[%s2 + $0x10] sm:$0xff] %v247
  %264 = vst [vmem:[%s2 + $0x18] sm:$0xff] %v248
  %265 = vst [vmem:[%s2 + $0x20] sm:$0xff] %v249
  %266 = vst [vmem:[%s2 + $0x28] sm:$0xff] %v250
  %267 = vst [vmem:[%s2 + $0x30] sm:$0xff] %v251
  %268 = vst [vmem:[%s2 + $0x38] sm:$0xff] %v252
  %269 = vst [vmem:[%s2 + $0x40] sm:$0xff] %v253
  %270 = vst [vmem:[%s2 + $0x48] sm:$0xff] %v254
  %271 = vst [vmem:[%s2 + $0x50] sm:$0xff] %v255
  %272 = vst [vmem:[%s2 + $0x58] sm:$0xff] %v256
  %273 = vst [vmem:[%s2 + $0x60] sm:$0xff] %v257
  %274 = vst [vmem:[%s2 + $0x68] sm:$0xff] %v258
  %275 = vst [vmem:[%s2 + $0x70] sm:$0xff] %v259
  %276 = vst [vmem:[%s2 + $0x78] sm:$0xff] %v260
  %v277 = vpack.c.bf16 %v170, %v167
  %v278 = vpack.c.bf16 %v178, %v175
  %v279 = vpack.c.bf16 %v186, %v183
  %v280 = vpack.c.bf16 %v194, %v191
  %v281 = vpack.c.bf16 %v202, %v199
  %v282 = vpack.c.bf16 %v210, %v207
  %v283 = vpack.c.bf16 %v218, %v215
  %v284 = vpack.c.bf16 %v226, %v223
  %285 = vst [vmem:[#allocation2] sm:$0xff] %v277
  %286 = vst [vmem:[#allocation2 + $0x8] sm:$0xff] %v278
  %287 = vst [vmem:[#allocation2 + $0x10] sm:$0xff] %v279
  %288 = vst [vmem:[#allocation2 + $0x18] sm:$0xff] %v280
  %289 = vst [vmem:[#allocation2 + $0x20] sm:$0xff] %v281
  %290 = vst [vmem:[#allocation2 + $0x28] sm:$0xff] %v282
  %291 = vst [vmem:[#allocation2 + $0x30] sm:$0xff] %v283
  %292 = vst [vmem:[#allocation2 + $0x38] sm:$0xff] %v284
  %v293 = vld [vmem:[%s0] sm:$0xf]
  %v294 = vld [vmem:[%s0 + $0x4] sm:$0xf]
  %v295 = vld [vmem:[%s0 + $0x8] sm:$0xf]
  %v296 = vld [vmem:[%s0 + $0xc] sm:$0xf]
  %v297 = vld [vmem:[%s0 + $0x10] sm:$0xf]
  %v298 = vld [vmem:[%s0 + $0x14] sm:$0xf]
  %v299 = vld [vmem:[%s0 + $0x18] sm:$0xf]
  %v300 = vld [vmem:[%s0 + $0x1c] sm:$0xf]
  %v301 = vld [vmem:[%s0 + $0x20] sm:$0xf]
  %v302 = vld [vmem:[%s0 + $0x24] sm:$0xf]
  %v303 = vld [vmem:[%s0 + $0x28] sm:$0xf]
  %v304 = vld [vmem:[%s0 + $0x2c] sm:$0xf]
  %v305 = vld [vmem:[%s0 + $0x30] sm:$0xf]
  %v306 = vld [vmem:[%s0 + $0x34] sm:$0xf]
  %v307 = vld [vmem:[%s0 + $0x38] sm:$0xf]
  %v308 = vld [vmem:[%s0 + $0x3c] sm:$0xf]
  %v309 = vld [vmem:[#allocation2] sm:$0xff]
  %v310 = vld [vmem:[#allocation2 + $0x8] sm:$0xff]
  %v311 = vld [vmem:[#allocation2 + $0x10] sm:$0xff]
  %v312 = vld [vmem:[#allocation2 + $0x18] sm:$0xff]
  %v313 = vld [vmem:[#allocation2 + $0x20] sm:$0xff]
  %v314 = vld [vmem:[#allocation2 + $0x28] sm:$0xff]
  %v315 = vld [vmem:[#allocation2 + $0x30] sm:$0xff]
  %v316 = vld [vmem:[#allocation2 + $0x38] sm:$0xff]
  %v333 = vunpack.c.l.b16 %v293
  %v334 = vunpack.c.l.b16 %v294
  %v335 = vunpack.c.l.b16 %v295
  %v336 = vunpack.c.l.b16 %v296
  %v337 = vunpack.c.l.b16 %v297
  %v338 = vunpack.c.l.b16 %v298
  %v339 = vunpack.c.l.b16 %v299
  %v340 = vunpack.c.l.b16 %v300
  %v341 = vunpack.c.l.b16 %v301
  %v342 = vunpack.c.l.b16 %v302
  %v343 = vunpack.c.l.b16 %v303
  %v344 = vunpack.c.l.b16 %v304
  %v345 = vunpack.c.l.b16 %v305
  %v346 = vunpack.c.l.b16 %v306
  %v347 = vunpack.c.l.b16 %v307
  %v348 = vunpack.c.l.b16 %v308
  %v349 = vpack.c.b16 %v334, %v333
  %v350 = vpack.c.b16 %v336, %v335
  %v351 = vpack.c.b16 %v338, %v337
  %v352 = vpack.c.b16 %v340, %v339
  %v353 = vpack.c.b16 %v342, %v341
  %v354 = vpack.c.b16 %v344, %v343
  %v355 = vpack.c.b16 %v346, %v345
  %v356 = vpack.c.b16 %v348, %v347
  %365 = vmatprep.subr.bf16.mxu0 0
  %366 = vmatpush1.bf16.msra.mxu0 %v309
  %367 = vmatprep.subr.bf16.mxu0 0
  %368 = vmatpush1.bf16.msra.mxu0 %v310
  %369 = vmatprep.subr.bf16.mxu0 0
  %370 = vmatpush1.bf16.msra.mxu0 %v311
  %371 = vmatprep.subr.bf16.mxu0 0
  %372 = vmatpush1.bf16.msra.mxu0 %v312
  %373 = vmatprep.subr.bf16.mxu0 0
  %374 = vmatpush1.bf16.msra.mxu0 %v313
  %375 = vmatprep.subr.bf16.mxu0 0
  %376 = vmatpush1.bf16.msra.mxu0 %v314
  %377 = vmatprep.subr.bf16.mxu0 0
  %378 = vmatpush1.bf16.msra.mxu0 %v315
  %379 = vmatprep.subr.bf16.mxu0 0
  %380 = vmatpush1.bf16.msra.mxu0 %v316
  %381 = vmatprep.subr.bf16.mxu0 0
  %382 = vmatpush1.bf16.msra.mxu0 0
  %383 = vmatprep.subr.bf16.mxu0 0
  %384 = vmatpush1.bf16.msra.mxu0 0
  %385 = vmatprep.subr.bf16.mxu0 0
  %386 = vmatpush1.bf16.msra.mxu0 0
  %387 = vmatprep.subr.bf16.mxu0 0
  %388 = vmatpush1.bf16.msra.mxu0 0
  %389 = vmatprep.subr.bf16.mxu0 0
  %390 = vmatpush1.bf16.msra.mxu0 0
  %391 = vmatprep.subr.bf16.mxu0 0
  %392 = vmatpush1.bf16.msra.mxu0 0
  %393 = vmatprep.subr.bf16.mxu0 0
  %394 = vmatpush1.bf16.msra.mxu0 0
  %395 = vmatprep.subr.bf16.mxu0 0
  %396 = vmatpush1.bf16.msra.mxu0 0
  %397 = vmatprep.mubr.bf16.mxu0 0
  %398 = vmatmul.mubr.bf16.gmra.mrb[0].mxu0 %v349
  %v399 = vpop.f32.mrb[0].mxu0
  %v400 = vadd.f32 0.0, %v399
  %v401 = vpop.f32.mrb[0].mxu0
  %v402 = vpop.f32.mrb[0].mxu0
  %v403 = vadd.f32 0.0, %v402
  %v404 = vpop.f32.mrb[0].mxu0
  %405 = vmatprep.mubr.bf16.mxu0 0
  %406 = vmatmul.mubr.bf16.gmra.mrb[0].mxu0 %v350
  %v407 = vpop.f32.mrb[0].mxu0
  %v408 = vadd.f32 0.0, %v407
  %v409 = vpop.f32.mrb[0].mxu0
  %v410 = vpop.f32.mrb[0].mxu0
  %v411 = vadd.f32 0.0, %v410
  %v412 = vpop.f32.mrb[0].mxu0
  %413 = vmatprep.mubr.bf16.mxu0 0
  %414 = vmatmul.mubr.bf16.gmra.mrb[0].mxu0 %v351
  %v415 = vpop.f32.mrb[0].mxu0
  %v416 = vadd.f32 0.0, %v415
  %v417 = vpop.f32.mrb[0].mxu0
  %v418 = vpop.f32.mrb[0].mxu0
  %v419 = vadd.f32 0.0, %v418
  %v420 = vpop.f32.mrb[0].mxu0
  %421 = vmatprep.mubr.bf16.mxu0 0
  %422 = vmatmul.mubr.bf16.gmra.mrb[0].mxu0 %v352
  %v423 = vpop.f32.mrb[0].mxu0
  %v424 = vadd.f32 0.0, %v423
  %v425 = vpop.f32.mrb[0].mxu0
  %v426 = vpop.f32.mrb[0].mxu0
  %v427 = vadd.f32 0.0, %v426
  %v428 = vpop.f32.mrb[0].mxu0
  %429 = vmatprep.mubr.bf16.mxu0 0
  %430 = vmatmul.mubr.bf16.gmra.mrb[0].mxu0 %v353
  %v431 = vpop.f32.mrb[0].mxu0
  %v432 = vadd.f32 0.0, %v431
  %v433 = vpop.f32.mrb[0].mxu0
  %v434 = vpop.f32.mrb[0].mxu0
  %v435 = vadd.f32 0.0, %v434
  %v436 = vpop.f32.mrb[0].mxu0
  %437 = vmatprep.mubr.bf16.mxu0 0
  %438 = vmatmul.mubr.bf16.gmra.mrb[0].mxu0 %v354
  %v439 = vpop.f32.mrb[0].mxu0
  %v440 = vadd.f32 0.0, %v439
  %v441 = vpop.f32.mrb[0].mxu0
  %v442 = vpop.f32.mrb[0].mxu0
  %v443 = vadd.f32 0.0, %v442
  %v444 = vpop.f32.mrb[0].mxu0
  %445 = vmatprep.mubr.bf16.mxu0 0
  %446 = vmatmul.mubr.bf16.gmra.mrb[0].mxu0 %v355
  %v447 = vpop.f32.mrb[0].mxu0
  %v448 = vadd.f32 0.0, %v447
  %v449 = vpop.f32.mrb[0].mxu0
  %v450 = vpop.f32.mrb[0].mxu0
  %v451 = vadd.f32 0.0, %v450
  %v452 = vpop.f32.mrb[0].mxu0
  %453 = vmatprep.mubr.bf16.mxu0 0
  %454 = vmatmul.mubr.bf16.gmra.mrb[0].mxu0 %v356
  %v455 = vpop.f32.mrb[0].mxu0
  %v456 = vadd.f32 0.0, %v455
  %v457 = vpop.f32.mrb[0].mxu0
  %v458 = vpop.f32.mrb[0].mxu0
  %v459 = vadd.f32 0.0, %v458
  %v460 = vpop.f32.mrb[0].mxu0
  %461 = vdwg.mxu0
  %v462 = vld [vmem:[%s2] sm:$0xff]
  %v463 = vld [vmem:[%s2 + $0x8] sm:$0xff]
  %v464 = vld [vmem:[%s2 + $0x10] sm:$0xff]
  %v465 = vld [vmem:[%s2 + $0x18] sm:$0xff]
  %v466 = vld [vmem:[%s2 + $0x20] sm:$0xff]
  %v467 = vld [vmem:[%s2 + $0x28] sm:$0xff]
  %v468 = vld [vmem:[%s2 + $0x30] sm:$0xff]
  %v469 = vld [vmem:[%s2 + $0x38] sm:$0xff]
  %v470 = vld [vmem:[%s2 + $0x40] sm:$0xff]
  %v471 = vld [vmem:[%s2 + $0x48] sm:$0xff]
  %v472 = vld [vmem:[%s2 + $0x50] sm:$0xff]
  %v473 = vld [vmem:[%s2 + $0x58] sm:$0xff]
  %v474 = vld [vmem:[%s2 + $0x60] sm:$0xff]
  %v475 = vld [vmem:[%s2 + $0x68] sm:$0xff]
  %v476 = vld [vmem:[%s2 + $0x70] sm:$0xff]
  %v477 = vld [vmem:[%s2 + $0x78] sm:$0xff]
  %v478 = vadd.f32 %v462, %v400
  %v479 = vadd.f32 %v463, %v403
  %v480 = vadd.f32 %v464, %v408
  %v481 = vadd.f32 %v465, %v411
  %v482 = vadd.f32 %v466, %v416
  %v483 = vadd.f32 %v467, %v419
  %v484 = vadd.f32 %v468, %v424
  %v485 = vadd.f32 %v469, %v427
  %v486 = vadd.f32 %v470, %v432
  %v487 = vadd.f32 %v471, %v435
  %v488 = vadd.f32 %v472, %v440
  %v489 = vadd.f32 %v473, %v443
  %v490 = vadd.f32 %v474, %v448
  %v491 = vadd.f32 %v475, %v451
  %v492 = vadd.f32 %v476, %v456
  %v493 = vadd.f32 %v477, %v459
  %494 = vst [vmem:[%s2] sm:$0xff] %v478
  %495 = vst [vmem:[%s2 + $0x8] sm:$0xff] %v479
  %496 = vst [vmem:[%s2 + $0x10] sm:$0xff] %v480
  %497 = vst [vmem:[%s2 + $0x18] sm:$0xff] %v481
  %498 = vst [vmem:[%s2 + $0x20] sm:$0xff] %v482
  %499 = vst [vmem:[%s2 + $0x28] sm:$0xff] %v483
  %500 = vst [vmem:[%s2 + $0x30] sm:$0xff] %v484
  %501 = vst [vmem:[%s2 + $0x38] sm:$0xff] %v485
  %502 = vst [vmem:[%s2 + $0x40] sm:$0xff] %v486
  %503 = vst [vmem:[%s2 + $0x48] sm:$0xff] %v487
  %504 = vst [vmem:[%s2 + $0x50] sm:$0xff] %v488
  %505 = vst [vmem:[%s2 + $0x58] sm:$0xff] %v489
  %506 = vst [vmem:[%s2 + $0x60] sm:$0xff] %v490
  %507 = vst [vmem:[%s2 + $0x68] sm:$0xff] %v491
  %508 = vst [vmem:[%s2 + $0x70] sm:$0xff] %v492
  %509 = vst [vmem:[%s2 + $0x78] sm:$0xff] %v493
  %v510 = vpack.c.bf16 %v403, %v400
  %v511 = vpack.c.bf16 %v411, %v408
  %v512 = vpack.c.bf16 %v419, %v416
  %v513 = vpack.c.bf16 %v427, %v424
  %v514 = vpack.c.bf16 %v435, %v432
  %v515 = vpack.c.bf16 %v443, %v440
  %v516 = vpack.c.bf16 %v451, %v448
  %v517 = vpack.c.bf16 %v459, %v456
  %518 = vst [vmem:[#allocation2] sm:$0xff] %v510
  %519 = vst [vmem:[#allocation2 + $0x8] sm:$0xff] %v511
  %520 = vst [vmem:[#allocation2 + $0x10] sm:$0xff] %v512
  %521 = vst [vmem:[#allocation2 + $0x18] sm:$0xff] %v513
  %522 = vst [vmem:[#allocation2 + $0x20] sm:$0xff] %v514
  %523 = vst [vmem:[#allocation2 + $0x28] sm:$0xff] %v515
  %524 = vst [vmem:[#allocation2 + $0x30] sm:$0xff] %v516
  %525 = vst [vmem:[#allocation2 + $0x38] sm:$0xff] %v517
  %v526 = vld [vmem:[%s2] sm:$0xff]
  %v527 = vld [vmem:[%s2 + $0x8] sm:$0xff]
  %v528 = vld [vmem:[%s2 + $0x10] sm:$0xff]
  %v529 = vld [vmem:[%s2 + $0x18] sm:$0xff]
  %v530 = vld [vmem:[%s2 + $0x20] sm:$0xff]
  %v531 = vld [vmem:[%s2 + $0x28] sm:$0xff]
  %v532 = vld [vmem:[%s2 + $0x30] sm:$0xff]
  %v533 = vld [vmem:[%s2 + $0x38] sm:$0xff]
  %v534 = vld [vmem:[%s2 + $0x40] sm:$0xff]
  %v535 = vld [vmem:[%s2 + $0x48] sm:$0xff]
  %v536 = vld [vmem:[%s2 + $0x50] sm:$0xff]
  %v537 = vld [vmem:[%s2 + $0x58] sm:$0xff]
  %v538 = vld [vmem:[%s2 + $0x60] sm:$0xff]
  %v539 = vld [vmem:[%s2 + $0x68] sm:$0xff]
  %v540 = vld [vmem:[%s2 + $0x70] sm:$0xff]
  %v541 = vld [vmem:[%s2 + $0x78] sm:$0xff]
  %v542 = vmul.f32 %v526, 0.33333334
  %v543 = vmul.f32 %v527, 0.33333334
  %v544 = vmul.f32 %v528, 0.33333334
  %v545 = vmul.f32 %v529, 0.33333334
  %v546 = vmul.f32 %v530, 0.33333334
  %v547 = vmul.f32 %v531, 0.33333334
  %v548 = vmul.f32 %v532, 0.33333334
  %v549 = vmul.f32 %v533, 0.33333334
  %v550 = vmul.f32 %v534, 0.33333334
  %v551 = vmul.f32 %v535, 0.33333334
  %v552 = vmul.f32 %v536, 0.33333334
  %v553 = vmul.f32 %v537, 0.33333334
  %v554 = vmul.f32 %v538, 0.33333334
  %v555 = vmul.f32 %v539, 0.33333334
  %v556 = vmul.f32 %v540, 0.33333334
  %v557 = vmul.f32 %v541, 0.33333334
  %558 = vst [vmem:[%s2] sm:$0xff] %v542
  %559 = vst [vmem:[%s2 + $0x8] sm:$0xff] %v543
  %560 = vst [vmem:[%s2 + $0x10] sm:$0xff] %v544
  %561 = vst [vmem:[%s2 + $0x18] sm:$0xff] %v545
  %562 = vst [vmem:[%s2 + $0x20] sm:$0xff] %v546
  %563 = vst [vmem:[%s2 + $0x28] sm:$0xff] %v547
  %564 = vst [vmem:[%s2 + $0x30] sm:$0xff] %v548
  %565 = vst [vmem:[%s2 + $0x38] sm:$0xff] %v549
  %566 = vst [vmem:[%s2 + $0x40] sm:$0xff] %v550
  %567 = vst [vmem:[%s2 + $0x48] sm:$0xff] %v551
  %568 = vst [vmem:[%s2 + $0x50] sm:$0xff] %v552
  %569 = vst [vmem:[%s2 + $0x58] sm:$0xff] %v553
  %570 = vst [vmem:[%s2 + $0x60] sm:$0xff] %v554
  %571 = vst [vmem:[%s2 + $0x68] sm:$0xff] %v555
  %572 = vst [vmem:[%s2 + $0x70] sm:$0xff] %v556
  %573 = vst [vmem:[%s2 + $0x78] sm:$0xff] %v557
  // Predicated region
  $region10: #{lightgcn_forward.2} parent=0 // pred_check
    _
  $region11: #{lightgcn_forward.2} parent=0 // pred_check_branch
    %575 = sbr.rel (0) target = $region13
  $region12: #{lightgcn_forward.2} parent=0 // pred_region
    _
  $region13: #{lightgcn_forward.2} parent=0 // pred_fallthru
    _
  // Predicated region
  $region14: #{lightgcn_forward.2} parent=0 // pred_check
    _
  $region15: #{lightgcn_forward.2} parent=0 // pred_check_branch
    %577 = sbr.rel (0) target = $region17
  $region16: #{lightgcn_forward.2} parent=0 // pred_region
    _
  $region17: #{lightgcn_forward.2} parent=0 // pred_fallthru
    _

</llo_original>
